<compile_context>
chip_gen: v5e
topology: v5e:2x2
jax: 0.10.0
libtpu: 0.0.40
codegen_flags: <defaults>
</compile_context>

<pallas_src>
import functools

import jax
import jax.numpy as jnp
from jax.experimental import pallas as pl
from jax.experimental.pallas import tpu as pltpu

EPS = 1e-5  # nn.GroupNorm default eps


def _round_up(x, m):
    return (x + m - 1) // m * m


def _pad_rows(x, rows, value=0):
    n = x.shape[0]
    if rows == n:
        return x
    return jnp.pad(x, ((0, rows - n), (0, 0)), constant_values=value)


def _bf16(x):
    return x.astype(jnp.bfloat16)


def _vmem_capacity_bytes():
    try:
        return int(pltpu.get_tpu_info().vmem_capacity_bytes)
    except Exception:          # query unavailable: assume v5e/v6e (128 MiB)
        return 128 * 1024 * 1024


def _gn1(x, gamma, beta):
    """GroupNorm(num_groups=1) over the channel (last) dim, per row.

    One-pass statistics (E[x] and E[x^2] computed together, var = E[x^2]-m^2)
    and a single fused multiply by gamma*rsqrt(var+eps): one fewer full
    elementwise pass and the two lane reductions are independent.
    """
    mean = jnp.mean(x, axis=-1, keepdims=True)
    mean2 = jnp.mean(x * x, axis=-1, keepdims=True)
    var = jnp.maximum(mean2 - mean * mean, 0.0)
    scale = gamma * jax.lax.rsqrt(var + EPS)
    return (x - mean) * scale + beta


# ---------------------------------------------------------------------------
# meta layer kernel:  [feat | meta4] @ W (no bias) -> GroupNorm(1) -> ReLU
#   feat @ W[:n_map]  : bf16 MXU GEMM (lane-aligned 128-wide K)
#   meta @ W[n_map:]  : 4 broadcast multiply-adds on the VPU (K=4 is MXU-hostile)
# ---------------------------------------------------------------------------
def _meta_kernel(x_ref, m_ref, w1_ref, w2_ref, g_ref, b_ref, o_ref):
    y = jnp.dot(_bf16(x_ref[...]), w1_ref[...],
                preferred_element_type=jnp.float32)
    m = m_ref[...]                      # [TN, 4]  f32
    w2 = w2_ref[...]                    # [4, n_map] f32
    for k in range(m.shape[1]):         # static, tiny
        y = y + m[:, k:k + 1] * w2[k:k + 1, :]
    o_ref[...] = jnp.maximum(_gn1(y, g_ref[...], b_ref[...]), 0.0)


def meta_linear_gn_relu(feat, meta, w, gamma, beta, *, tile_rows=512):
    n, n_map = feat.shape
    n_meta = meta.shape[1]
    w1 = _bf16(w[:n_map])               # [n_map, n_map] bf16 (MXU operand)
    w2 = w[n_map:]                      # [n_meta, n_map] f32 (VPU)
    tn = min(tile_rows, _round_up(n, 8))
    n_pad = _round_up(n, tn)

    out = pl.pallas_call(
        _meta_kernel,
        out_shape=jax.ShapeDtypeStruct((n_pad, n_map), jnp.float32),
        grid=(n_pad // tn,),
        in_specs=[
            pl.BlockSpec((tn, n_map), lambda i: (i, 0)),
            pl.BlockSpec((tn, n_meta), lambda i: (i, 0)),
            pl.BlockSpec((n_map, n_map), lambda i: (0, 0)),
            pl.BlockSpec((n_meta, n_map), lambda i: (0, 0)),
            pl.BlockSpec((1, n_map), lambda i: (0, 0)),
            pl.BlockSpec((1, n_map), lambda i: (0, 0)),
        ],
        out_specs=pl.BlockSpec((tn, n_map), lambda i: (i, 0)),
        compiler_params=pltpu.CompilerParams(
            dimension_semantics=("parallel",)),
    )(_pad_rows(feat, n_pad), _pad_rows(meta, n_pad), w1, w2, gamma, beta)
    return out[:n]


# ---------------------------------------------------------------------------
# Att block kernel
#   grid = (node tiles [parallel], actor tiles [arbitrary / reduction])
#   acc_ref accumulates sum_actor(mask * z) per node tile; the wc2 GEMM and
#   the rest of the per-node tail run once in the j==last epilogue.
#   The per-pair body is skipped entirely when the scalar-prefetched pair
#   count for the (node, actor) tile is zero.
# ---------------------------------------------------------------------------
def _att_kernel(cnt_ref,
                agts_ref, actrs_ref, ab_ref,
                ctx_ref, cctrs_ref, cb_ref, cc_ref,
                wd1_ref, bd1_ref, wd2_ref, gd2_ref, bd2_ref,
                wqa_ref, gq_ref, bq_ref,
                wc1h_ref, wc1q_ref, gc1_ref, bc1_ref,
                wc2_ref, gn_ref, bn_ref,
                wl_ref, gl_ref, bl_ref,
                o_ref,
                acc_ref, qn_ref, awa_ref,
                *, dist_th, n_ctx):
    i = pl.program_id(0)
    j = pl.program_id(1)
    last = pl.num_programs(1) - 1

    agts = agts_ref[...]                                   # [TN, n_agt] f32
    tn, n_agt = agts.shape

    # --- per-node-tile work (first actor tile only) ------------------------
    @pl.when(j == 0)
    def _():
        acc_ref[...] = jnp.zeros_like(acc_ref)
        # Fused [Wq | Wa] GEMM: one 128x256 MXU push instead of two 128-wide.
        qa = jnp.dot(_bf16(agts), wqa_ref[...],
                     preferred_element_type=jnp.float32)   # [TN, n_ctx+n_agt]
        q = jnp.maximum(_gn1(qa[:, :n_ctx], gq_ref[...], bq_ref[...]), 0.0)
        qn_ref[...] = jnp.dot(_bf16(q), wc1q_ref[...],
                              preferred_element_type=jnp.float32)
        awa_ref[...] = qa[:, n_ctx:]                       # agts @ Wa, reused in epilogue

    # --- per-pair work, skipped when this tile pair has no in-range edge ---
    @pl.when(cnt_ref[i, j] > 0)
    def _():
        ctx = ctx_ref[...]                                 # [TA, n_ctx] f32
        ta = ctx.shape[0]
        p = tn * ta

        # pairwise geometry: pure VPU broadcasts, no MXU, no sqrt
        actrs = actrs_ref[...]                             # [TN, 2]
        cctrs = cctrs_ref[...]                             # [TA, 2]
        dx = actrs[:, None, 0:1] - cctrs[None, :, 0:1]     # [TN, TA, 1]
        dy = actrs[:, None, 1:2] - cctrs[None, :, 1:2]
        dist2 = dx * dx + dy * dy
        same_batch = ab_ref[...][:, None, :] == cb_ref[...][None, :, :]
        mask = jnp.logical_and(dist2 <= dist_th * dist_th, same_batch)

        # dist branch: Linear(2,n_ctx)+bias -> ReLU -> Linear(GN,ReLU)
        wd1 = wd1_ref[...]                                 # [2, n_ctx] f32
        h = jnp.maximum(dx * wd1[0:1, :] + dy * wd1[1:2, :] + bd1_ref[...], 0.0)
        h = h.reshape(p, n_ctx)                            # [P, n_ctx]
        h = jnp.dot(_bf16(h), wd2_ref[...], preferred_element_type=jnp.float32)
        h = jnp.maximum(_gn1(h, gd2_ref[...], bd2_ref[...]), 0.0)

        # ctx fuse: concat-GEMM split
        #   z = h @ Wc1_h (per pair) + (q @ Wc1_q) per node + (ctx @ Wc1_c) per actor
        #   (the last two terms are precomputed: qn_ref at j==0, cc_ref outside).
        z = jnp.dot(_bf16(h), wc1h_ref[...], preferred_element_type=jnp.float32)
        z = z.reshape(tn, ta, n_agt) + qn_ref[...][:, None, :] + cc_ref[...][None, :, :]
        z = jnp.maximum(_gn1(z, gc1_ref[...], bc1_ref[...]), 0.0)
        z = jnp.where(mask, z, 0.0)

        # index_add_ equivalent: sum the actor axis (wc2 hoisted to epilogue)
        acc_ref[...] += jnp.sum(z, axis=1)                 # [TN, n_agt]

    # --- epilogue at the last actor tile ------------------------------------
    @pl.when(j == last)
    def _():
        agg = jnp.dot(_bf16(acc_ref[...]), wc2_ref[...],
                      preferred_element_type=jnp.float32)  # hoisted wc2 GEMM
        out = awa_ref[...] + agg                           # agts @ Wa + index_add_
        out = jnp.maximum(_gn1(out, gn_ref[...], bn_ref[...]), 0.0)
        out = jnp.dot(_bf16(out), wl_ref[...],
                      preferred_element_type=jnp.float32)
        out = _gn1(out, gl_ref[...], bl_ref[...])          # act=False
        o_ref[...] = jnp.maximum(out + agts, 0.0)          # += res, ReLU


def _tile_pair_counts(actrs, ab, cctrs, cb, tn, ta, dist_th):
    """[node_tiles, actor_tiles] int32: # in-range same-batch pairs per tile pair."""
    d = actrs[:, None, :] - cctrs[None, :, :]
    d2 = jnp.sum(d * d, axis=-1)
    m = (d2 <= dist_th * dist_th) & (ab[:, 0][:, None] == cb[None, :, 0])
    n_pad, a_pad = m.shape
    m = m.reshape(n_pad // tn, tn, a_pad // ta, ta)
    return jnp.sum(m, axis=(1, 3)).astype(jnp.int32)


def att_block(agts, agt_ctrs, agt_b, ctx, ctx_ctrs, ctx_b, prm, dist_th, *,
              tile_n=128, tile_a=None, vmem_limit_bytes=None):
    """One LaneGCN Att block. agt_b / ctx_b are int32 [rows, 1] batch ids."""
    # TODO(synk): len(ctx)==0 fallback branch of Att is not implemented.
    n, n_agt = agts.shape
    a, n_ctx = ctx.shape

    vmem_cap = _vmem_capacity_bytes()
    if tile_a is None:
        # v7x (64 MiB VMEM/TC): halve the actor tile so the per-pair
        # intermediates (~12-15 MiB) leave double-buffering headroom.
        # v5e/v6e (128 MiB): ta=128 (ta=256 is viable after the wc2/e removal
        # but kept off by default for safety margin).
        tile_a = 64 if vmem_cap <= 64 * 1024 * 1024 else 128
    if vmem_limit_bytes is None:
        vmem_limit_bytes = min(vmem_cap - 16 * 1024 * 1024, 96 * 1024 * 1024)

    tn = min(tile_n, _round_up(n, 8))
    # v7x has 2 TensorCores sharing the "parallel" node axis: keep >= 2 node
    # tiles whenever the graph is big enough to split.
    if tn > 64 and _round_up(n, tn) // tn < 2:
        tn = 64
    ta = min(tile_a, _round_up(a, 8))
    n_pad = _round_up(n, tn)
    a_pad = _round_up(a, ta)

    # Padding: padded ctx rows get batch id -2, padded node rows -1, so padded
    # pairs never pass the same-batch test (zero contribution); padded node
    # rows are sliced off below.
    agts_p = _pad_rows(agts, n_pad)
    actrs_p = _pad_rows(agt_ctrs, n_pad)
    ab_p = _pad_rows(agt_b.astype(jnp.int32), n_pad, value=-1)
    ctx_p = _pad_rows(ctx, a_pad)
    cctrs_p = _pad_rows(ctx_ctrs, a_pad)
    cb_p = _pad_rows(ctx_b.astype(jnp.int32), a_pad, value=-2)

    wc1 = prm['wc1']
    # Hoisted out of the grid: ctx @ Wc1_ctx depends only on the actor row.
    cc_p = jnp.dot(_bf16(ctx_p), _bf16(wc1[2 * n_ctx:]),
                   preferred_element_type=jnp.float32)      # [a_pad, n_agt]
    # Fused query/agt weight for the single 128x(n_ctx+n_agt) GEMM at j==0.
    wqa = _bf16(jnp.concatenate([prm['wq'], prm['wa']], axis=1))
    # Per-(node tile, actor tile) in-range pair counts -> skip empty tiles.
    counts = _tile_pair_counts(actrs_p, ab_p, cctrs_p, cb_p, tn, ta,
                               float(dist_th))

    weights = [
        prm['wd1'], prm['bd1'], _bf16(prm['wd2']), prm['gd2'], prm['bd2'],
        wqa, prm['gq'], prm['bq'],
        _bf16(wc1[:n_ctx]), _bf16(wc1[n_ctx:2 * n_ctx]),
        prm['gc1'], prm['bc1'],
        _bf16(prm['wc2']), prm['gn'], prm['bn'],
        _bf16(prm['wl']), prm['gl'], prm['bl'],
    ]

    # index_maps receive the scalar-prefetch ref as a trailing positional arg
    node = lambda i, j, cnt: (i, 0)
    actor = lambda i, j, cnt: (j, 0)
    full = lambda i, j, cnt: (0, 0)
    in_specs = [
        pl.BlockSpec((tn, n_agt), node),
        pl.BlockSpec((tn, 2), node),
        pl.BlockSpec((tn, 1), node),
        pl.BlockSpec((ta, n_ctx), actor),
        pl.BlockSpec((ta, 2), actor),
        pl.BlockSpec((ta, 1), actor),
        pl.BlockSpec((ta, n_agt), actor),          # precomputed ctx @ Wc1_ctx
    ] + [pl.BlockSpec(w.shape, full) for w in weights]

    grid_spec = pltpu.PrefetchScalarGridSpec(
        num_scalar_prefetch=1,
        grid=(n_pad // tn, a_pad // ta),
        in_specs=in_specs,
        out_specs=pl.BlockSpec((tn, n_agt), node),
        scratch_shapes=[pltpu.VMEM((tn, n_agt), jnp.float32),   # acc (pre-wc2)
                        pltpu.VMEM((tn, n_agt), jnp.float32),   # q @ Wc1_q
                        pltpu.VMEM((tn, n_agt), jnp.float32)],  # agts @ Wa
    )

    out = pl.pallas_call(
        functools.partial(_att_kernel, dist_th=float(dist_th), n_ctx=n_ctx),
        out_shape=jax.ShapeDtypeStruct((n_pad, n_agt), jnp.float32),
        grid_spec=grid_spec,
        compiler_params=pltpu.CompilerParams(
            dimension_semantics=("parallel", "arbitrary"),
            vmem_limit_bytes=int(vmem_limit_bytes)),
    )(counts, agts_p, actrs_p, ab_p, ctx_p, cctrs_p, cb_p, cc_p, *weights)
    return out[:n]


# ---------------------------------------------------------------------------
# A2M forward (glue in plain JAX, hot paths in Pallas)
# ---------------------------------------------------------------------------
def _batch_ids(list_of_idcs):
    return jnp.concatenate(
        [jnp.full((int(idx.shape[0]), 1), k, jnp.int32)
         for k, idx in enumerate(list_of_idcs)], axis=0)


def a2m_forward(params, feat, graph, actors, actor_idcs, actor_ctrs, dist_th):
    meta = jnp.concatenate(
        [graph['turn'], graph['control'][:, None], graph['intersect'][:, None]],
        axis=1)
    f = meta_linear_gn_relu(feat, meta, params['meta']['w'],
                            params['meta']['g'], params['meta']['b'])
    node_ctrs = jnp.concatenate(graph['ctrs'], axis=0)
    node_b = _batch_ids(graph['idcs'])
    a_ctrs = jnp.concatenate(actor_ctrs, axis=0)
    a_b = _batch_ids(actor_idcs)
    for prm in params['att']:
        f = att_block(f, node_ctrs, node_b, actors, a_ctrs, a_b, prm, dist_th)
    return f


# ---------------------------------------------------------------------------
# Pure-JAX reference (same math incl. bf16 MXU operands) for verification.
# The wc2 GEMM is applied after the masked sum, which equals the PyTorch
# per-edge order exactly in real arithmetic (bias-free Linear is linear).
# ---------------------------------------------------------------------------
def _bmm(a, w):
    return jnp.dot(a.astype(jnp.bfloat16), w.astype(jnp.bfloat16),
                   preferred_element_type=jnp.float32)


def att_ref(agts, agt_ctrs, agt_b, ctx, ctx_ctrs, ctx_b, p, dist_th):
    n, n_agt = agts.shape
    a, n_ctx = ctx.shape
    res = agts
    diff = agt_ctrs[:, None, :] - ctx_ctrs[None, :, :]
    dist2 = jnp.sum(diff ** 2, axis=-1)
    mask = (dist2 <= dist_th ** 2) & (agt_b[:, 0][:, None] == ctx_b[None, :, 0])
    d2 = diff.reshape(n * a, 2)
    h = jnp.maximum(d2[:, 0:1] * p['wd1'][0:1, :] + d2[:, 1:2] * p['wd1'][1:2, :]
                    + p['bd1'], 0.0)
    h = jnp.maximum(_gn1(_bmm(h, p['wd2']), p['gd2'], p['bd2']), 0.0)
    q = jnp.maximum(_gn1(_bmm(agts, p['wq']), p['gq'], p['bq']), 0.0)
    wc1 = p['wc1']
    z = (_bmm(h, wc1[:n_ctx]).reshape(n, a, n_agt)
         + _bmm(q, wc1[n_ctx:2 * n_ctx])[:, None, :]
         + _bmm(ctx, wc1[2 * n_ctx:])[None, :, :])
    z = jnp.maximum(_gn1(z, p['gc1'], p['bc1']), 0.0)
    agg = jnp.sum(jnp.where(mask[:, :, None], z, 0.0), axis=1)
    agg = _bmm(agg, p['wc2'])
    out = _bmm(agts, p['wa']) + agg
    out = jnp.maximum(_gn1(out, p['gn'], p['bn']), 0.0)
    out = _gn1(_bmm(out, p['wl']), p['gl'], p['bl'])
    return jnp.maximum(out + res, 0.0)


def a2m_ref(params, feat, graph, actors, actor_idcs, actor_ctrs, dist_th):
    meta = jnp.concatenate(
        [graph['turn'], graph['control'][:, None], graph['intersect'][:, None]],
        axis=1)
    w = params['meta']['w']
    n_map = feat.shape[1]
    y = _bmm(feat, w[:n_map])
    for k in range(meta.shape[1]):
        y = y + meta[:, k:k + 1] * w[n_map + k:n_map + k + 1, :]
    f = jnp.maximum(_gn1(y, params['meta']['g'], params['meta']['b']), 0.0)
    node_ctrs = jnp.concatenate(graph['ctrs'], axis=0)
    node_b = _batch_ids(graph['idcs'])
    a_ctrs = jnp.concatenate(actor_ctrs, axis=0)
    a_b = _batch_ids(actor_idcs)
    for prm in params['att']:
        f = att_ref(f, node_ctrs, node_b, actors, a_ctrs, a_b, prm, dist_th)
    return f


# ---------------------------------------------------------------------------
# Deterministic parameter init (synthetic; shapes follow the PyTorch __init__)
# ---------------------------------------------------------------------------
def _w(key, shape, scale=0.1):
    return (scale * jax.random.normal(key, shape)).astype(jnp.float32)


def init_att_params(key, n_agt, n_ctx):
    ks = iter(jax.random.split(key, 24))
    p = {}
    p['wd1'] = _w(next(ks), (2, n_ctx))
    p['bd1'] = _w(next(ks), (1, n_ctx))
    p['wd2'] = _w(next(ks), (n_ctx, n_ctx))
    p['gd2'] = 1.0 + _w(next(ks), (1, n_ctx))
    p['bd2'] = _w(next(ks), (1, n_ctx))
    p['wq'] = _w(next(ks), (n_agt, n_ctx))
    p['gq'] = 1.0 + _w(next(ks), (1, n_ctx))
    p['bq'] = _w(next(ks), (1, n_ctx))
    p['wc1'] = _w(next(ks), (3 * n_ctx, n_agt))
    p['gc1'] = 1.0 + _w(next(ks), (1, n_agt))
    p['bc1'] = _w(next(ks), (1, n_agt))
    p['wc2'] = _w(next(ks), (n_agt, n_agt))
    p['wa'] = _w(next(ks), (n_agt, n_agt))
    p['gn'] = 1.0 + _w(next(ks), (1, n_agt))
    p['bn'] = _w(next(ks), (1, n_agt))
    p['wl'] = _w(next(ks), (n_agt, n_agt))
    p['gl'] = 1.0 + _w(next(ks), (1, n_agt))
    p['bl'] = _w(next(ks), (1, n_agt))
    return p


def init_a2m_params(key, n_map, n_actor):
    k_meta, k_g, k_b, k_a0, k_a1 = jax.random.split(key, 5)
    return {
        'meta': {'w': _w(k_meta, (n_map + 4, n_map)),
                 'g': 1.0 + _w(k_g, (1, n_map)),
                 'b': _w(k_b, (1, n_map))},
        'att': [init_att_params(k_a0, n_map, n_actor),
                init_att_params(k_a1, n_map, n_actor)],
    }


if __name__ == "__main__":
    key = jax.random.PRNGKey(0)
    n_map, n_actor = 128, 128
    config = {'n_map': n_map, 'n_actor': n_actor, 'actor2map_dist': 7.0}

    N, A = 16, 8                     # lane nodes, actors
    node_counts = [9, 7]             # per-batch node counts (batch_size = 2)
    actor_counts = [5, 3]            # per-batch actor counts

    ks = jax.random.split(key, 10)
    feat = _w(ks[0], (N, n_map), scale=1.0)
    turn = _w(ks[1], (N, 2), scale=1.0)
    control = (jax.random.uniform(ks[2], (N,)) > 0.5).astype(jnp.float32)
    intersect = (jax.random.uniform(ks[3], (N,)) > 0.5).astype(jnp.float32)
    node_ctrs = jax.random.uniform(ks[4], (N, 2), minval=-10.0, maxval=10.0,
                                   dtype=jnp.float32)
    actors = _w(ks[5], (A, n_actor), scale=1.0)
    actor_ctrs_all = jax.random.uniform(ks[6], (A, 2), minval=-10.0, maxval=10.0,
                                        dtype=jnp.float32)

    n_off = [0, node_counts[0], node_counts[0] + node_counts[1]]
    a_off = [0, actor_counts[0], actor_counts[0] + actor_counts[1]]
    graph = {
        'turn': turn,
        'control': control,
        'intersect': intersect,
        'idcs': [jnp.arange(n_off[i], n_off[i + 1]) for i in range(2)],
        'ctrs': [node_ctrs[n_off[i]:n_off[i + 1]] for i in range(2)],
    }
    actor_idcs = [jnp.arange(a_off[i], a_off[i + 1]) for i in range(2)]
    actor_ctrs = [actor_ctrs_all[a_off[i]:a_off[i + 1]] for i in range(2)]

    params = init_a2m_params(jax.random.PRNGKey(42), n_map, n_actor)

    out = a2m_forward(params, feat, graph, actors, actor_idcs, actor_ctrs,
                      config['actor2map_dist'])
    out = jax.block_until_ready(out)

    ref = a2m_ref(params, feat, graph, actors, actor_idcs, actor_ctrs,
                  config['actor2map_dist'])
    err = float(jnp.max(jnp.abs(out - ref)))
    assert out.shape == (N, n_map) and out.dtype == jnp.float32
    assert err < 1e-2, f"mismatch vs reference: max abs err = {err}"
    print("KERNEL_OK")
</pallas_src>

<mosaic_0001>
module attributes {stable_mosaic.version = 11 : i64} {
  func.func @_meta_kernel(%arg0: i32, %arg1: memref<16x128xf32, #tpu.memory_space<vmem>>, %arg2: memref<16x4xf32, #tpu.memory_space<vmem>>, %arg3: memref<128x128xbf16, #tpu.memory_space<vmem>>, %arg4: memref<4x128xf32, #tpu.memory_space<vmem>>, %arg5: memref<1x128xf32, #tpu.memory_space<vmem>>, %arg6: memref<1x128xf32, #tpu.memory_space<vmem>>, %arg7: memref<16x128xf32, #tpu.memory_space<vmem>>) attributes {dimension_semantics = [#tpu.dimension_semantics<parallel>], iteration_bounds = array<i64: 1>, scalar_prefetch = 0 : i64, scratch_operands = 0 : i64, tpu.core_type = #tpu.core_type<tc>, window_params = [{transform_indices = @transform_0, window_bounds = array<i64: 16, 128>}, {transform_indices = @transform_1, window_bounds = array<i64: 16, 4>}, {pipeline_mode = #tpu.pipeline_mode<synchronous>, transform_indices = @transform_2, window_bounds = array<i64: 128, 128>}, {pipeline_mode = #tpu.pipeline_mode<synchronous>, transform_indices = @transform_3, window_bounds = array<i64: 4, 128>}, {pipeline_mode = #tpu.pipeline_mode<synchronous>, transform_indices = @transform_4, window_bounds = array<i64: 1, 128>}, {pipeline_mode = #tpu.pipeline_mode<synchronous>, transform_indices = @transform_5, window_bounds = array<i64: 1, 128>}, {transform_indices = @transform_6, window_bounds = array<i64: 16, 128>}]} {
    %c0 = arith.constant 0 : index
    %c0_0 = arith.constant 0 : index
    %0 = vector.load %arg1[%c0, %c0_0] : memref<16x128xf32, #tpu.memory_space<vmem>>, vector<16x128xf32>
    %1 = arith.truncf %0 : vector<16x128xf32> to vector<16x128xbf16>
    %c0_1 = arith.constant 0 : index
    %c0_2 = arith.constant 0 : index
    %2 = vector.load %arg3[%c0_1, %c0_2] : memref<128x128xbf16, #tpu.memory_space<vmem>>, vector<128x128xbf16>
    %cst = arith.constant dense<0.000000e+00> : vector<16x128xf32>
    %3 = tpu.matmul %1, %2, %cst {dimension_numbers = #tpu.dot_dimension_numbers<[1], [0], [0], [1], [0, 0, 1, 1], [], []>} : vector<16x128xbf16>, vector<128x128xbf16>, vector<16x128xf32> -> vector<16x128xf32>
    %c0_3 = arith.constant 0 : index
    %c0_4 = arith.constant 0 : index
    %4 = vector.load %arg2[%c0_3, %c0_4] : memref<16x4xf32, #tpu.memory_space<vmem>>, vector<16x4xf32>
    %c0_5 = arith.constant 0 : index
    %c0_6 = arith.constant 0 : index
    %5 = vector.load %arg4[%c0_5, %c0_6] : memref<4x128xf32, #tpu.memory_space<vmem>>, vector<4x128xf32>
    %6 = vector.extract_strided_slice %4 {offsets = [0, 0], sizes = [16, 1], strides = [1, 1]} : vector<16x4xf32> to vector<16x1xf32>
    %7 = vector.extract_strided_slice %5 {offsets = [0, 0], sizes = [1, 128], strides = [1, 1]} : vector<4x128xf32> to vector<1x128xf32>
    %8 = vector.broadcast %6 : vector<16x1xf32> to vector<16x128xf32>
    %9 = vector.broadcast %7 : vector<1x128xf32> to vector<16x128xf32>
    %10 = arith.mulf %8, %9 : vector<16x128xf32>
    %11 = arith.addf %3, %10 : vector<16x128xf32>
    %12 = vector.extract_strided_slice %4 {offsets = [0, 1], sizes = [16, 1], strides = [1, 1]} : vector<16x4xf32> to vector<16x1xf32>
    %13 = vector.extract_strided_slice %5 {offsets = [1, 0], sizes = [1, 128], strides = [1, 1]} : vector<4x128xf32> to vector<1x128xf32>
    %14 = vector.broadcast %12 : vector<16x1xf32> to vector<16x128xf32>
    %15 = vector.broadcast %13 : vector<1x128xf32> to vector<16x128xf32>
    %16 = arith.mulf %14, %15 : vector<16x128xf32>
    %17 = arith.addf %11, %16 : vector<16x128xf32>
    %18 = vector.extract_strided_slice %4 {offsets = [0, 2], sizes = [16, 1], strides = [1, 1]} : vector<16x4xf32> to vector<16x1xf32>
    %19 = vector.extract_strided_slice %5 {offsets = [2, 0], sizes = [1, 128], strides = [1, 1]} : vector<4x128xf32> to vector<1x128xf32>
    %20 = vector.broadcast %18 : vector<16x1xf32> to vector<16x128xf32>
    %21 = vector.broadcast %19 : vector<1x128xf32> to vector<16x128xf32>
    %22 = arith.mulf %20, %21 : vector<16x128xf32>
    %23 = arith.addf %17, %22 : vector<16x128xf32>
    %24 = vector.extract_strided_slice %4 {offsets = [0, 3], sizes = [16, 1], strides = [1, 1]} : vector<16x4xf32> to vector<16x1xf32>
    %25 = vector.extract_strided_slice %5 {offsets = [3, 0], sizes = [1, 128], strides = [1, 1]} : vector<4x128xf32> to vector<1x128xf32>
    %26 = vector.broadcast %24 : vector<16x1xf32> to vector<16x128xf32>
    %27 = vector.broadcast %25 : vector<1x128xf32> to vector<16x128xf32>
    %28 = arith.mulf %26, %27 : vector<16x128xf32>
    %29 = arith.addf %23, %28 : vector<16x128xf32>
    %c0_7 = arith.constant 0 : index
    %c0_8 = arith.constant 0 : index
    %30 = vector.load %arg5[%c0_7, %c0_8] : memref<1x128xf32, #tpu.memory_space<vmem>>, vector<1x128xf32>
    %c0_9 = arith.constant 0 : index
    %c0_10 = arith.constant 0 : index
    %31 = vector.load %arg6[%c0_9, %c0_10] : memref<1x128xf32, #tpu.memory_space<vmem>>, vector<1x128xf32>
    %cst_11 = arith.constant dense<0.000000e+00> : vector<16xf32>
    %32 = vector.multi_reduction <add>, %29, %cst_11 [1] : vector<16x128xf32> to vector<16xf32>
    %33 = vector.shape_cast %32 : vector<16xf32> to vector<16x1xf32>
    %cst_12 = arith.constant 1.280000e+02 : f32
    %34 = vector.broadcast %cst_12 : f32 to vector<16x1xf32>
    %35 = arith.divf %33, %34 : vector<16x1xf32>
    %36 = arith.mulf %29, %29 : vector<16x128xf32>
    %cst_13 = arith.constant dense<0.000000e+00> : vector<16xf32>
    %37 = vector.multi_reduction <add>, %36, %cst_13 [1] : vector<16x128xf32> to vector<16xf32>
    %38 = vector.shape_cast %37 : vector<16xf32> to vector<16x1xf32>
    %cst_14 = arith.constant 1.280000e+02 : f32
    %39 = vector.broadcast %cst_14 : f32 to vector<16x1xf32>
    %40 = arith.divf %38, %39 : vector<16x1xf32>
    %41 = arith.mulf %35, %35 : vector<16x1xf32>
    %42 = arith.subf %40, %41 : vector<16x1xf32>
    %cst_15 = arith.constant 0.000000e+00 : f32
    %43 = vector.broadcast %cst_15 : f32 to vector<16x1xf32>
    %44 = arith.maximumf %42, %43 : vector<16x1xf32>
    %cst_16 = arith.constant 9.99999974E-6 : f32
    %45 = vector.broadcast %cst_16 : f32 to vector<16x1xf32>
    %46 = arith.addf %44, %45 : vector<16x1xf32>
    %47 = math.rsqrt %46 : vector<16x1xf32>
    %48 = vector.broadcast %30 : vector<1x128xf32> to vector<16x128xf32>
    %49 = vector.broadcast %47 : vector<16x1xf32> to vector<16x128xf32>
    %50 = arith.mulf %48, %49 : vector<16x128xf32>
    %51 = vector.broadcast %35 : vector<16x1xf32> to vector<16x128xf32>
    %52 = arith.subf %29, %51 : vector<16x128xf32>
    %53 = arith.mulf %52, %50 : vector<16x128xf32>
    %54 = vector.broadcast %31 : vector<1x128xf32> to vector<16x128xf32>
    %55 = arith.addf %53, %54 : vector<16x128xf32>
    %cst_17 = arith.constant 0.000000e+00 : f32
    %56 = vector.broadcast %cst_17 : f32 to vector<16x128xf32>
    %57 = arith.maximumf %55, %56 : vector<16x128xf32>
    %c0_18 = arith.constant 0 : index
    %c0_19 = arith.constant 0 : index
    %58 = vector.load %arg7[%c0_18, %c0_19] : memref<16x128xf32, #tpu.memory_space<vmem>>, vector<16x128xf32>
    tpu.vector_store %arg7[%c0_18, %c0_19], %57 {strides = array<i32>} : memref<16x128xf32, #tpu.memory_space<vmem>>, vector<16x128xf32>,
    return
  }
  func.func @transform_0(%arg0: i32) -> (i32, i32) {
    %c0_i32 = arith.constant 0 : i32
    %c0_i32_0 = arith.constant 0 : i32
    return %arg0, %c0_i32 : i32, i32
  }
  func.func @transform_1(%arg0: i32) -> (i32, i32) {
    %c0_i32 = arith.constant 0 : i32
    %c0_i32_0 = arith.constant 0 : i32
    return %arg0, %c0_i32 : i32, i32
  }
  func.func @transform_2(%arg0: i32) -> (i32, i32) {
    %c0_i32 = arith.constant 0 : i32
    %c0_i32_0 = arith.constant 0 : i32
    %c0_i32_1 = arith.constant 0 : i32
    return %c0_i32, %c0_i32_0 : i32, i32
  }
  func.func @transform_3(%arg0: i32) -> (i32, i32) {
    %c0_i32 = arith.constant 0 : i32
    %c0_i32_0 = arith.constant 0 : i32
    %c0_i32_1 = arith.constant 0 : i32
    return %c0_i32, %c0_i32_0 : i32, i32
  }
  func.func @transform_4(%arg0: i32) -> (i32, i32) {
    %c0_i32 = arith.constant 0 : i32
    %c0_i32_0 = arith.constant 0 : i32
    %c0_i32_1 = arith.constant 0 : i32
    return %c0_i32, %c0_i32_0 : i32, i32
  }
  func.func @transform_5(%arg0: i32) -> (i32, i32) {
    %c0_i32 = arith.constant 0 : i32
    %c0_i32_0 = arith.constant 0 : i32
    %c0_i32_1 = arith.constant 0 : i32
    return %c0_i32, %c0_i32_0 : i32, i32
  }
  func.func @transform_6(%arg0: i32) -> (i32, i32) {
    %c0_i32 = arith.constant 0 : i32
    %c0_i32_0 = arith.constant 0 : i32
    return %arg0, %c0_i32 : i32, i32
  }
}

</mosaic_0001>

<llo_original>
// kernel: tpu_custom_call.1
$region0: #{tpu_custom_call.1}
  #allocation0 [shape = 'u32[]', space=smem, size = 0x4, offset = 0x4, fixed_abs, tag = 'smem constant byte address 0x4 - core index']
  #allocation1 [shape = 'u32[72,128]{1,0:T(1,128)}', space=vmem, size = 0x9000, scoped, tag = 'internal scratch']
  %s0 = inlined_call_operand.vmem [shape: f32[16,128], index: 0, kind: input, shape index: {}]
  %s1 = inlined_call_operand.vmem [shape: f32[16,4], index: 1, kind: input, shape index: {}]
  %s2 = inlined_call_operand.hbm [shape: bf16[128,128], index: 2, kind: input, shape index: {}]
  %s3 = inlined_call_operand.vmem [shape: f32[4,128], index: 3, kind: input, shape index: {}]
  %s4 = inlined_call_operand.vmem [shape: f32[1,128], index: 4, kind: input, shape index: {}]
  %s5 = inlined_call_operand.vmem [shape: f32[1,128], index: 5, kind: input, shape index: {}]
  %s6 = inlined_call_operand.hbm [shape: f32[16,128], index: 6, kind: output, shape index: {}]
  %s7 = sld [smem:[#allocation0]]
  $region38: #{tpu_custom_call.1} parent=0
    _
  %s9 = ssub.s32 1, %s7
  %s10 = scalar_select 0, %s9, %s7
  $region1: #{tpu_custom_call.1} parent=0
    #allocation2 [shape = 'u8[32768]{0}', space=vmem, size = 0x8000, scoped, tag = 'input window, operand 2, single buffered']
    #allocation3 [shape = 's32[1]{0}', space=sflag, size = 0x4, scoped, tag = 'scoped memory for tpu_custom_call.1']
    #allocation4 [shape = 's32[1]{0}', space=sflag, size = 0x4, scoped, tag = 'scoped memory for tpu_custom_call.1']
    #allocation5 [shape = 'u8[8192]{0}', space=vmem, size = 0x2000, scoped, tag = 'output window, operand 0, single buffered']
    %11 = vsyncpa [#allocation3], 0
    %12 = vsyncpa [#allocation4], 0
    // Predicated region
    $region2: #{tpu_custom_call.1} parent=1 // pred_check
      _
    $region3: #{tpu_custom_call.1} parent=1 // pred_check_branch
      %14 = sbr.rel (0) target = $region5
    $region4: #{tpu_custom_call.1} parent=1 // pred_region
      _
    $region5: #{tpu_custom_call.1} parent=1 // pred_fallthru
      _
    // Predicated region
    $region6: #{tpu_custom_call.1} parent=1 // pred_check
      _
    $region7: #{tpu_custom_call.1} parent=1 // pred_check_branch
      %16 = sbr.rel (0) target = $region9
    $region8: #{tpu_custom_call.1} parent=1 // pred_region
      _
    $region9: #{tpu_custom_call.1} parent=1 // pred_fallthru
      _
    // Predicated region
    $region10: #{tpu_custom_call.1} parent=1 // pred_check
      _
    $region11: #{tpu_custom_call.1} parent=1 // pred_check_branch
      %18 = sbr.rel (0) target = $region13
    $region12: #{tpu_custom_call.1} parent=1 // pred_region
      %20 = vsyncadd [#allocation3], 0
      %s21 = sshll.u32 %s2, 4
      %s22 = int_to_ptr.hbm [resolvable:$true] %s21
      %s23 = sshll.u32 [#allocation2], 4
      %s24 = int_to_ptr.vmem [resolvable:$true] %s23
      %29 = dma.hbm_to_vmem [thread:$0]  %s22, 1024, %s24, [#allocation3], 64, 64, 4
    $region13: #{tpu_custom_call.1} parent=1 // pred_fallthru
      _
    // Predicated region
    $region14: #{tpu_custom_call.1} parent=1 // pred_check
      _
    $region15: #{tpu_custom_call.1} parent=1 // pred_check_branch
      %31 = sbr.rel (0) target = $region17
    $region16: #{tpu_custom_call.1} parent=1 // pred_region
      _
    $region17: #{tpu_custom_call.1} parent=1 // pred_fallthru
      _
    // Predicated region
    $region18: #{tpu_custom_call.1} parent=1 // pred_check
      _
    $region19: #{tpu_custom_call.1} parent=1 // pred_check_branch
      %33 = sbr.rel (0) target = $region21
    $region20: #{tpu_custom_call.1} parent=1 // pred_region
      _
    $region21: #{tpu_custom_call.1} parent=1 // pred_fallthru
      _
    // Predicated region
    $region22: #{tpu_custom_call.1} parent=1 // pred_check
      _
    $region23: #{tpu_custom_call.1} parent=1 // pred_check_branch
      %35 = sbr.rel (0) target = $region25
    $region24: #{tpu_custom_call.1} parent=1 // pred_region
      _
    $region25: #{tpu_custom_call.1} parent=1 // pred_fallthru
      _
    // Predicated region
    $region26: #{tpu_custom_call.1} parent=1 // pred_check
      _
    $region27: #{tpu_custom_call.1} parent=1 // pred_check_branch
      %37 = sbr.rel (0) target = $region29
    $region28: #{tpu_custom_call.1} parent=1 // pred_region
      %39 = dma.done [#allocation3], 1024
    $region29: #{tpu_custom_call.1} parent=1 // pred_fallthru
      _
    %v40 = vld [vmem:[%s0] sm:$0xff]
    %v41 = vld [vmem:[%s0 + $0x8] sm:$0xff]
    %v42 = vpack.c.bf16 %v41, %v40
    %v43 = vld [vmem:[#allocation2] sm:$0xf]
    %v44 = vld [vmem:[#allocation2 + $0x4] sm:$0xf]
    %v45 = vld [vmem:[#allocation2 + $0x8] sm:$0xf]
    %v46 = vld [vmem:[#allocation2 + $0xc] sm:$0xf]
    %v47 = vld [vmem:[#allocation2 + $0x10] sm:$0xf]
    %v48 = vld [vmem:[#allocation2 + $0x14] sm:$0xf]
    %v49 = vld [vmem:[#allocation2 + $0x18] sm:$0xf]
    %v50 = vld [vmem:[#allocation2 + $0x1c] sm:$0xf]
    %v51 = vld [vmem:[#allocation2 + $0x20] sm:$0xf]
    %v52 = vld [vmem:[#allocation2 + $0x24] sm:$0xf]
    %v53 = vld [vmem:[#allocation2 + $0x28] sm:$0xf]
    %v54 = vld [vmem:[#allocation2 + $0x2c] sm:$0xf]
    %v55 = vld [vmem:[#allocation2 + $0x30] sm:$0xf]
    %v56 = vld [vmem:[#allocation2 + $0x34] sm:$0xf]
    %v57 = vld [vmem:[#allocation2 + $0x38] sm:$0xf]
    %v58 = vld [vmem:[#allocation2 + $0x3c] sm:$0xf]
    %v59 = vld [vmem:[%s1] sm:$0xff]
    %v60 = vld [vmem:[%s1 + $0x8] sm:$0xff]
    %v61 = vld [vmem:[%s3] sm:$0xf]
    %63 = vset.pattern.permute.xlu0 0
    %64 = vperm.xlu0 %63, %v59
    %v65 = vpop.permute.xlu0 %64
    %68 = vset.pattern.permute.xlu0 0
    %69 = vperm.xlu0 %68, %v60
    %v70 = vpop.permute.xlu0 %69
    %v72 = vperm.slane %v61, 0
    %v73 = vmul.f32 %v65, %v72
    %v74 = vmul.f32 %v70, %v72
    %v91 = vunpack.c.l.b16 %v43
    %v92 = vunpack.c.l.b16 %v44
    %v93 = vunpack.c.l.b16 %v45
    %v94 = vunpack.c.l.b16 %v46
    %v95 = vunpack.c.l.b16 %v47
    %v96 = vunpack.c.l.b16 %v48
    %v97 = vunpack.c.l.b16 %v49
    %v98 = vunpack.c.l.b16 %v50
    %v99 = vunpack.c.l.b16 %v51
    %v100 = vunpack.c.l.b16 %v52
    %v101 = vunpack.c.l.b16 %v53
    %v102 = vunpack.c.l.b16 %v54
    %v103 = vunpack.c.l.b16 %v55
    %v104 = vunpack.c.l.b16 %v56
    %v105 = vunpack.c.l.b16 %v57
    %v106 = vunpack.c.l.b16 %v58
    %v107 = vpack.c.b16 %v92, %v91
    %v108 = vpack.c.b16 %v94, %v93
    %v109 = vpack.c.b16 %v96, %v95
    %v110 = vpack.c.b16 %v98, %v97
    %v111 = vpack.c.b16 %v100, %v99
    %v112 = vpack.c.b16 %v102, %v101
    %v113 = vpack.c.b16 %v104, %v103
    %v114 = vpack.c.b16 %v106, %v105
    %123 = vmatpush.bf16.msra.mxu0 %v114
    %124 = vmatpush.bf16.msra.mxu0 %v113
    %125 = vmatpush.bf16.msra.mxu0 %v112
    %126 = vmatpush.bf16.msra.mxu0 %v111
    %127 = vmatpush.bf16.msra.mxu0 %v110
    %128 = vmatpush.bf16.msra.mxu0 %v109
    %129 = vmatpush.bf16.msra.mxu0 %v108
    %130 = vmatpush.bf16.msra.mxu0 %v107
    %131 = vmatmul.bf16.gmra.mxu0 %v42
    %v132 = vpop.f32.mrf.mxu0
    %v133 = vadd.f32 %v73, %v132
    %v134 = vpop.f32.mrf.mxu0
    %v135 = vadd.f32 %v74, %v134
    %136 = vdwg.mxu0
    %137 = vset.pattern.permute.xlu0 1
    %138 = vperm.xlu0 %137, %v59
    %v139 = vpop.permute.xlu0 %138
    %141 = vset.pattern.permute.xlu0 1
    %142 = vperm.xlu0 %141, %v60
    %v143 = vpop.permute.xlu0 %142
    %v145 = vperm.slane %v61, 1
    %v146 = vmul.f32 %v139, %v145
    %v147 = vmul.f32 %v143, %v145
    %v148 = vadd.f32 %v133, %v146
    %v149 = vadd.f32 %v135, %v147
    %150 = vset.pattern.permute.xlu0 2
    %151 = vperm.xlu0 %150, %v59
    %v152 = vpop.permute.xlu0 %151
    %154 = vset.pattern.permute.xlu0 2
    %155 = vperm.xlu0 %154, %v60
    %v156 = vpop.permute.xlu0 %155
    %v158 = vperm.slane %v61, 2
    %v159 = vmul.f32 %v152, %v158
    %v160 = vmul.f32 %v156, %v158
    %v161 = vadd.f32 %v148, %v159
    %v162 = vadd.f32 %v149, %v160
    %163 = vset.pattern.permute.xlu0 3
    %164 = vperm.xlu0 %163, %v59
    %v165 = vpop.permute.xlu0 %164
    %167 = vset.pattern.permute.xlu0 3
    %168 = vperm.xlu0 %167, %v60
    %v169 = vpop.permute.xlu0 %168
    %v171 = vperm.slane %v61, 3
    %v172 = vmul.f32 %v165, %v171
    %v173 = vmul.f32 %v169, %v171
    %v174 = vadd.f32 %v161, %v172
    %v175 = vadd.f32 %v162, %v173
    %v176 = vld [vmem:[%s4] sm:$0x1]
    %v177 = vld [vmem:[%s5] sm:$0x1]
    %178 = vadd.xlane.f32.xlu0 %v174
    %v179 = vpop.xlane.xlu0 %178
    %180 = vadd.xlane.f32.xlu0 %v175
    %v181 = vpop.xlane.xlu0 %180
    %v182 = vrcp.pop 128.0
    %v183 = vmul.f32 128.0, %v182
    %v184 = vsub.f32 1.0, %v183
    %v185 = vmul.f32 %v182, %v184
    %v186 = vadd.f32 %v182, %v185
    %vm187 = vweird.f32 %v182
    %v188 = vsel %vm187, %v182, %v186
    %v189 = vmul.f32 %v179, %v188
    %v190 = vmul.f32 %v181, %v188
    %v191 = vmul.f32 %v174, %v174
    %v192 = vmul.f32 %v175, %v175
    %193 = vadd.xlane.f32.xlu0 %v191
    %v194 = vpop.xlane.xlu0 %193
    %195 = vadd.xlane.f32.xlu0 %v192
    %v196 = vpop.xlane.xlu0 %195
    %v197 = vmul.f32 %v194, %v188
    %v198 = vmul.f32 %v196, %v188
    %v199 = vmul.f32 %v189, %v189
    %v200 = vmul.f32 %v190, %v190
    %v201 = vsub.f32 %v197, %v199
    %v202 = vsub.f32 %v198, %v200
    %v203 = vmax.f32 %v201, 0.0
    %v204 = vmax.f32 %v202, 0.0
    %v205 = vadd.f32 %v203, 1e-05
    %v206 = vadd.f32 %v204, 1e-05
    %v207 = vrsqrt.pop %v205
    %v208 = vmul.f32 %v207, %v205
    %v209 = vmul.f32 %v208, %v207
    %v210 = vmul.f32 0.5, %v209
    %v211 = vsub.f32 1.5, %v210
    %v212 = vmul.f32 %v207, %v211
    %vm213 = vweird.f32 %v205
    %vm214 = vweird.f32 %v207
    %vm215 = vmor %vm213, %vm214
    %v216 = vsel %vm215, %v207, %v212
    %v217 = vrsqrt.pop %v206
    %v218 = vmul.f32 %v217, %v206
    %v219 = vmul.f32 %v218, %v217
    %v220 = vmul.f32 0.5, %v219
    %v221 = vsub.f32 1.5, %v220
    %v222 = vmul.f32 %v217, %v221
    %vm223 = vweird.f32 %v206
    %vm224 = vweird.f32 %v217
    %vm225 = vmor %vm223, %vm224
    %v226 = vsel %vm225, %v217, %v222
    %v228 = vperm.slane %v176, 0
    %v230 = vmul.f32 %v228, %v216
    %v231 = vmul.f32 %v228, %v226
    %v232 = vsub.f32 %v174, %v189
    %v233 = vsub.f32 %v175, %v190
    %v234 = vmul.f32 %v232, %v230
    %v235 = vmul.f32 %v233, %v231
    %v237 = vperm.slane %v177, 0
    %v239 = vadd.f32 %v234, %v237
    %v240 = vadd.f32 %v235, %v237
    %v241 = vmax.f32 %v239, 0.0
    %v242 = vmax.f32 %v240, 0.0
    %243 = vst [vmem:[#allocation5] sm:$0xff] %v241
    %244 = vst [vmem:[#allocation5 + $0x8] sm:$0xff] %v242
    // Predicated region
    $region30: #{tpu_custom_call.1} parent=1 // pred_check
      _
    $region31: #{tpu_custom_call.1} parent=1 // pred_check_branch
      %246 = sbr.rel (0) target = $region33
    $region32: #{tpu_custom_call.1} parent=1 // pred_region
      %248 = vsyncadd [#allocation4], 0
      %s249 = sshll.u32 [#allocation5], 4
      %s250 = int_to_ptr.vmem [resolvable:$true] %s249
      %s251 = sshll.u32 %s6, 4
      %s252 = int_to_ptr.hbm [resolvable:$true] %s251
      %257 = dma.vmem_to_hbm [thread:$0]  %s250, 256, %s252, [#allocation4], 128, 128, 8
    $region33: #{tpu_custom_call.1} parent=1 // pred_fallthru
      _
    // Predicated region
    $region34: #{tpu_custom_call.1} parent=1 // pred_check
      _
    $region35: #{tpu_custom_call.1} parent=1 // pred_check_branch
      %259 = sbr.rel (0) target = $region37
    $region36: #{tpu_custom_call.1} parent=1 // pred_region
      %261 = dma.done [#allocation4], 256
    $region37: #{tpu_custom_call.1} parent=1 // pred_fallthru
      _
    %262 = vsyncpa [#allocation3], 1
    %263 = vsyncpa [#allocation4], 1

</llo_original>
